<compile_context>
chip_gen: v7x
topology: tpu7x:2x2x1
jax: 0.10.0
libtpu: 0.0.40
codegen_flags: <defaults>
</compile_context>

<pallas_src>
import jax
import jax.numpy as jnp
from jax import lax
from jax.experimental import pallas as pl
from jax.experimental.pallas import tpu as pltpu

LEAKY_SLOPE = 0.01  # PyTorch F.leaky_relu default negative_slope


def _round_up(x, m):
    return ((x + m - 1) // m) * m


def mlp3_kernel(x_ref, w_ref, b_ref, o_ref):
    # x_ref: (tm, n_mlp)   w_ref: (2, n_mlp)   b_ref: (2, 1) f32   o_ref: (2, tm)
    x = x_ref[...]
    w = w_ref[...]
    b = b_ref[...]  # already float32

    # Transposed linear on the MXU: z = W @ x^T + b -> (2, tm).
    # Contract over n_mlp (dim 1 of both operands); result is lane-dense in tm.
    z = lax.dot_general(
        w, x,
        dimension_numbers=(((1,), (1,)), ((), ())),
        preferred_element_type=jnp.float32,
    ) + b

    # LeakyReLU (negative_slope = 0.01).
    z = jnp.where(z >= 0, z, LEAKY_SLOPE * z)

    # Exact, numerically-stable softmax over the 2 logits (sublane axis).
    # Only 2 sublanes -> trivially cheap cross-sublane max/sum; exact divide.
    m = jnp.max(z, axis=0, keepdims=True)        # (1, tm)
    e = jnp.exp(z - m)                           # (2, tm)
    s = jnp.sum(e, axis=0, keepdims=True)        # (1, tm)

    # Single full-block, lane-dense, unmasked store.
    o_ref[...] = (e / s).astype(o_ref.dtype)


def mlp3_forward(x, w, b, *, tm=8192):
    """MLP_3 forward.

    x: [N, n_mlp]
    w: [2, n_mlp]   (PyTorch nn.Linear weight layout, no pre-transpose)
    b: [2]          (nn.Linear bias)
    returns: [N, 2] softmax weights (rows sum to 1).
    """
    N, n_mlp = x.shape
    assert w.shape == (2, n_mlp)
    b2 = jnp.reshape(b, (2, 1)).astype(jnp.float32)  # keep bias in f32

    itemsize = jnp.dtype(x.dtype).itemsize
    # Lane-padding-aware VMEM cap: a (tm, n_mlp) tile occupies tm x
    # round_up(n_mlp, 128) lanes in VMEM.  Cap the double-buffered x tile at
    # ~16 MiB -> fits v7x's 64 MiB VMEM / 32 MiB scoped budget with headroom,
    # and is comfortably inside v5e/v6e's 128 MiB.
    n_mlp_pad = _round_up(n_mlp, 128)
    budget = 16 << 20
    tm_cap = max(128, (budget // (2 * n_mlp_pad * itemsize)) // 128 * 128)
    tm = max(128, (int(tm) // 128) * 128)
    tm = min(tm, tm_cap)

    # Even-split tiling: minimal 128-row padding first, then split into g
    # grid steps so per-step tail waste is < 128 rows.  Keep g >= 2 when the
    # problem is big enough so the "parallel" axis can shard across the two
    # v7x TensorCores and the pipeline has something to overlap.
    n128 = _round_up(N, 128)
    g = -(-n128 // tm)
    if g == 1 and n128 >= 256:
        g = 2
    tm = _round_up(-(-n128 // g), 128)   # multiple of 128, <= tm_cap
    n_pad = tm * g

    if n_pad != N:
        x = jnp.pad(x, ((0, n_pad - N), (0, 0)))

    out_t = pl.pallas_call(
        mlp3_kernel,
        out_shape=jax.ShapeDtypeStruct((2, n_pad), x.dtype),
        grid_spec=pltpu.PrefetchScalarGridSpec(
            num_scalar_prefetch=0,
            grid=(g,),
            in_specs=[
                pl.BlockSpec((tm, n_mlp), lambda i: (i, 0)),   # x row tile
                pl.BlockSpec((2, n_mlp), lambda i: (0, 0)),    # W (resident)
                pl.BlockSpec((2, 1), lambda i: (0, 0)),        # bias (f32)
            ],
            out_specs=pl.BlockSpec((2, tm), lambda i: (0, i)),  # lane-dense
        ),
        compiler_params=pltpu.CompilerParams(
            dimension_semantics=("parallel",),
            vmem_limit_bytes=32 * 1024 * 1024,
        ),
    )(x, w, b2)

    # Slice first (cheap), then transpose back to the PyTorch (N, 2) layout.
    # TODO(synk): downstream consumers that can take the (2, N) layout should
    # use out_t directly and skip this transpose entirely.
    return out_t[:, :N].T


def reference_forward(x, w, b):
    z = (x.astype(jnp.float32) @ w.astype(jnp.float32).T
         + jnp.reshape(b, (1, 2)).astype(jnp.float32))
    z = jnp.where(z >= 0, z, LEAKY_SLOPE * z)
    return jax.nn.softmax(z, axis=1)


if __name__ == "__main__":
    key = jax.random.PRNGKey(0)
    kx, kw, kb, kx2 = jax.random.split(key, 4)

    # Small shapes consistent with the module: batch N=8, n_mlp=32.
    N, n_mlp = 8, 32
    x = jax.random.normal(kx, (N, n_mlp), dtype=jnp.float32)
    bound = 1.0 / float(n_mlp) ** 0.5
    w = jax.random.uniform(kw, (2, n_mlp), jnp.float32, -bound, bound)
    b = jax.random.uniform(kb, (2,), jnp.float32, -bound, bound)

    out = jax.block_until_ready(mlp3_forward(x, w, b))
    ref = reference_forward(x, w, b)
    assert out.shape == (N, 2)
    assert jnp.allclose(out, ref, atol=1e-4, rtol=1e-4)
    assert jnp.allclose(jnp.sum(out, axis=1), jnp.ones((N,)), atol=1e-5)

    # Secondary check: non-tile-aligned N exercises the multi-step grid,
    # even-split padding path and lane-dense tiled output.
    N2 = 2500
    x2 = jax.random.normal(kx2, (N2, n_mlp), dtype=jnp.float32)
    out2 = jax.block_until_ready(mlp3_forward(x2, w, b))
    ref2 = reference_forward(x2, w, b)
    assert out2.shape == (N2, 2)
    assert jnp.allclose(out2, ref2, atol=1e-4, rtol=1e-4)
    assert jnp.allclose(jnp.sum(out2, axis=1), jnp.ones((N2,)), atol=1e-5)

    print("KERNEL_OK")
</pallas_src>

<mosaic_0001>
module attributes {stable_mosaic.version = 11 : i64} {
  func.func @mlp3_kernel(%arg0: i32, %arg1: memref<128x32xf32, #tpu.memory_space<vmem>>, %arg2: memref<2x32xf32, #tpu.memory_space<vmem>>, %arg3: memref<2x1xf32, #tpu.memory_space<vmem>>, %arg4: memref<2x128xf32, #tpu.memory_space<vmem>>) attributes {dimension_semantics = [#tpu.dimension_semantics<parallel>], iteration_bounds = array<i64: 1>, scalar_prefetch = 0 : i64, scratch_operands = 0 : i64, tpu.core_type = #tpu.core_type<tc>, window_params = [{transform_indices = @transform_0, window_bounds = array<i64: 128, 32>}, {pipeline_mode = #tpu.pipeline_mode<synchronous>, transform_indices = @transform_1, window_bounds = array<i64: 2, 32>}, {pipeline_mode = #tpu.pipeline_mode<synchronous>, transform_indices = @transform_2, window_bounds = array<i64: 2, 1>}, {transform_indices = @transform_3, window_bounds = array<i64: 2, 128>}]} {
    %c0 = arith.constant 0 : index
    %c0_0 = arith.constant 0 : index
    %0 = vector.load %arg1[%c0, %c0_0] : memref<128x32xf32, #tpu.memory_space<vmem>>, vector<128x32xf32>
    %c0_1 = arith.constant 0 : index
    %c0_2 = arith.constant 0 : index
    %1 = vector.load %arg2[%c0_1, %c0_2] : memref<2x32xf32, #tpu.memory_space<vmem>>, vector<2x32xf32>
    %c0_3 = arith.constant 0 : index
    %c0_4 = arith.constant 0 : index
    %2 = vector.load %arg3[%c0_3, %c0_4] : memref<2x1xf32, #tpu.memory_space<vmem>>, vector<2x1xf32>
    %cst = arith.constant dense<0.000000e+00> : vector<2x128xf32>
    %3 = tpu.matmul %1, %0, %cst {dimension_numbers = #tpu.dot_dimension_numbers<[1], [1], [0], [0], [0, 0, 1, 0], [], []>} : vector<2x32xf32>, vector<128x32xf32>, vector<2x128xf32> -> vector<2x128xf32>
    %4 = vector.broadcast %2 : vector<2x1xf32> to vector<2x128xf32>
    %5 = arith.addf %3, %4 : vector<2x128xf32>
    %cst_5 = arith.constant 0.000000e+00 : f32
    %6 = vector.broadcast %cst_5 : f32 to vector<2x128xf32>
    %7 = arith.cmpf oge, %5, %6 : vector<2x128xf32>
    %cst_6 = arith.constant 0.00999999977 : f32
    %8 = vector.broadcast %cst_6 : f32 to vector<2x128xf32>
    %9 = arith.mulf %8, %5 : vector<2x128xf32>
    %10 = arith.select %7, %5, %9 : vector<2x128xi1>, vector<2x128xf32>
    %cst_7 = arith.constant dense<0xFF800000> : vector<128xf32>
    %11 = vector.multi_reduction <maximumf>, %10, %cst_7 [0] : vector<2x128xf32> to vector<128xf32>
    %12 = vector.shape_cast %11 : vector<128xf32> to vector<1x128xf32>
    %13 = vector.broadcast %12 : vector<1x128xf32> to vector<2x128xf32>
    %14 = arith.subf %10, %13 : vector<2x128xf32>
    %15 = math.exp %14 : vector<2x128xf32>
    %cst_8 = arith.constant dense<0.000000e+00> : vector<128xf32>
    %16 = vector.multi_reduction <add>, %15, %cst_8 [0] : vector<2x128xf32> to vector<128xf32>
    %17 = vector.shape_cast %16 : vector<128xf32> to vector<1x128xf32>
    %18 = vector.broadcast %17 : vector<1x128xf32> to vector<2x128xf32>
    %19 = arith.divf %15, %18 : vector<2x128xf32>
    %c0_9 = arith.constant 0 : index
    %c0_10 = arith.constant 0 : index
    %20 = vector.load %arg4[%c0_9, %c0_10] : memref<2x128xf32, #tpu.memory_space<vmem>>, vector<2x128xf32>
    tpu.vector_store %arg4[%c0_9, %c0_10], %19 {strides = array<i32>} : memref<2x128xf32, #tpu.memory_space<vmem>>, vector<2x128xf32>,
    return
  }
  func.func @transform_0(%arg0: i32) -> (i32, i32) {
    %c0_i32 = arith.constant 0 : i32
    %c0_i32_0 = arith.constant 0 : i32
    return %arg0, %c0_i32 : i32, i32
  }
  func.func @transform_1(%arg0: i32) -> (i32, i32) {
    %c0_i32 = arith.constant 0 : i32
    %c0_i32_0 = arith.constant 0 : i32
    %c0_i32_1 = arith.constant 0 : i32
    return %c0_i32, %c0_i32_0 : i32, i32
  }
  func.func @transform_2(%arg0: i32) -> (i32, i32) {
    %c0_i32 = arith.constant 0 : i32
    %c0_i32_0 = arith.constant 0 : i32
    %c0_i32_1 = arith.constant 0 : i32
    return %c0_i32, %c0_i32_0 : i32, i32
  }
  func.func @transform_3(%arg0: i32) -> (i32, i32) {
    %c0_i32 = arith.constant 0 : i32
    %c0_i32_0 = arith.constant 0 : i32
    return %c0_i32, %arg0 : i32, i32
  }
}

</mosaic_0001>

<llo_original>
// kernel: tpu_custom_call.1
$region0: #{tpu_custom_call.1}
  #allocation0 [shape = 'u32[]', space=smem, size = 0x4, offset = 0x4, fixed_abs, tag = 'smem constant byte address 0x4 - core index']
  #allocation1 [shape = 'u32[144,128]{1,0:T(1,128)}', space=vmem, size = 0x12000, scoped, tag = 'internal scratch']
  %s0 = inlined_call_operand.vmem [shape: f32[128,32], index: 0, kind: input, shape index: {}]
  %s1 = inlined_call_operand.vmem [shape: f32[2,32], index: 1, kind: input, shape index: {}]
  %s2 = inlined_call_operand.vmem [shape: f32[2,1], index: 2, kind: input, shape index: {}]
  %s3 = inlined_call_operand.hbm [shape: f32[2,128], index: 3, kind: output, shape index: {}]
  %s4 = sld [smem:[#allocation0]]
  $region22: #{tpu_custom_call.1} parent=0
    _
  %s6 = ssub.s32 1, %s4
  %s7 = scalar_select 0, %s6, %s4
  $region1: #{tpu_custom_call.1} parent=0
    #allocation2 [shape = 'u8[1024]{0}', space=vmem, size = 0x400, scoped, tag = 'output window, operand 0, single buffered']
    #allocation3 [shape = 's32[1]{0}', space=sflag, size = 0x4, scoped, tag = 'scoped memory for tpu_custom_call.1']
    %8 = vsyncpa [#allocation3], 0
    // Predicated region
    $region2: #{tpu_custom_call.1} parent=1 // pred_check
      _
    $region3: #{tpu_custom_call.1} parent=1 // pred_check_branch
      %10 = sbr.rel (0) target = $region5
    $region4: #{tpu_custom_call.1} parent=1 // pred_region
      _
    $region5: #{tpu_custom_call.1} parent=1 // pred_fallthru
      _
    // Predicated region
    $region6: #{tpu_custom_call.1} parent=1 // pred_check
      _
    $region7: #{tpu_custom_call.1} parent=1 // pred_check_branch
      %12 = sbr.rel (0) target = $region9
    $region8: #{tpu_custom_call.1} parent=1 // pred_region
      _
    $region9: #{tpu_custom_call.1} parent=1 // pred_fallthru
      _
    // Predicated region
    $region10: #{tpu_custom_call.1} parent=1 // pred_check
      _
    $region11: #{tpu_custom_call.1} parent=1 // pred_check_branch
      %14 = sbr.rel (0) target = $region13
    $region12: #{tpu_custom_call.1} parent=1 // pred_region
      _
    $region13: #{tpu_custom_call.1} parent=1 // pred_fallthru
      _
    %v15 = vld [vmem:[%s0] sm:$0xff]
    %v16 = vld [vmem:[%s0 + $0x8] sm:$0xff]
    %v17 = vld [vmem:[%s0 + $0x10] sm:$0xff]
    %v18 = vld [vmem:[%s0 + $0x18] sm:$0xff]
    %v19 = vld [vmem:[%s0 + $0x20] sm:$0xff]
    %v20 = vld [vmem:[%s0 + $0x28] sm:$0xff]
    %v21 = vld [vmem:[%s0 + $0x30] sm:$0xff]
    %v22 = vld [vmem:[%s0 + $0x38] sm:$0xff]
    %v23 = vld [vmem:[%s0 + $0x40] sm:$0xff]
    %v24 = vld [vmem:[%s0 + $0x48] sm:$0xff]
    %v25 = vld [vmem:[%s0 + $0x50] sm:$0xff]
    %v26 = vld [vmem:[%s0 + $0x58] sm:$0xff]
    %v27 = vld [vmem:[%s0 + $0x60] sm:$0xff]
    %v28 = vld [vmem:[%s0 + $0x68] sm:$0xff]
    %v29 = vld [vmem:[%s0 + $0x70] sm:$0xff]
    %v30 = vld [vmem:[%s0 + $0x78] sm:$0xff]
    %v31 = vld [vmem:[%s1] sm:$0x3]
    %v32 = vld [vmem:[%s2] sm:$0x3]
    %34 = vset.pattern.permute.xlu0 0
    %35 = vperm.xlu0 %34, %v32
    %v36 = vpop.permute.xlu0 %35
    %vm38 = vcmask 261120
    %v40 = vsel %vm38, %v31, 0
    %v43 = vsel %vm38, %v15, 0
    %v46 = vsel %vm38, %v16, 0
    %v49 = vsel %vm38, %v17, 0
    %v52 = vsel %vm38, %v18, 0
    %v55 = vsel %vm38, %v19, 0
    %v58 = vsel %vm38, %v20, 0
    %v61 = vsel %vm38, %v21, 0
    %v64 = vsel %vm38, %v22, 0
    %v67 = vsel %vm38, %v23, 0
    %v70 = vsel %vm38, %v24, 0
    %v73 = vsel %vm38, %v25, 0
    %v76 = vsel %vm38, %v26, 0
    %v79 = vsel %vm38, %v27, 0
    %v82 = vsel %vm38, %v28, 0
    %v85 = vsel %vm38, %v29, 0
    %v88 = vsel %vm38, %v30, 0
    %90 = vmatprep.subr.mxu0 0.0
    %91 = vmatpush1.xpose.msra.mxu0 %v43
    %92 = vmatprep.subr.mxu0 0.0
    %93 = vmatpush1.xpose.msra.mxu0 %v46
    %94 = vmatprep.subr.mxu0 0.0
    %95 = vmatpush1.xpose.msra.mxu0 %v49
    %96 = vmatprep.subr.mxu0 0.0
    %97 = vmatpush1.xpose.msra.mxu0 %v52
    %98 = vmatprep.subr.mxu0 0.0
    %99 = vmatpush1.xpose.msra.mxu0 %v55
    %100 = vmatprep.subr.mxu0 0.0
    %101 = vmatpush1.xpose.msra.mxu0 %v58
    %102 = vmatprep.subr.mxu0 0.0
    %103 = vmatpush1.xpose.msra.mxu0 %v61
    %104 = vmatprep.subr.mxu0 0.0
    %105 = vmatpush1.xpose.msra.mxu0 %v64
    %106 = vmatprep.subr.mxu0 0.0
    %107 = vmatpush1.xpose.msra.mxu0 %v67
    %108 = vmatprep.subr.mxu0 0.0
    %109 = vmatpush1.xpose.msra.mxu0 %v70
    %110 = vmatprep.subr.mxu0 0.0
    %111 = vmatpush1.xpose.msra.mxu0 %v73
    %112 = vmatprep.subr.mxu0 0.0
    %113 = vmatpush1.xpose.msra.mxu0 %v76
    %114 = vmatprep.subr.mxu0 0.0
    %115 = vmatpush1.xpose.msra.mxu0 %v79
    %116 = vmatprep.subr.mxu0 0.0
    %117 = vmatpush1.xpose.msra.mxu0 %v82
    %118 = vmatprep.subr.mxu0 0.0
    %119 = vmatpush1.xpose.msra.mxu0 %v85
    %120 = vmatprep.subr.mxu0 0.0
    %121 = vmatpush1.xpose.msra.mxu0 %v88
    %122 = vmatprep.subr.mxu0 0.0
    %123 = vmatpush1.xpose.msra.mxu0 0.0
    %124 = vmatprep.subr.mxu0 0.0
    %125 = vmatpush1.xpose.msra.mxu0 0.0
    %126 = vmatprep.subr.mxu0 0.0
    %127 = vmatpush1.xpose.msra.mxu0 0.0
    %128 = vmatprep.subr.mxu0 0.0
    %129 = vmatpush1.xpose.msra.mxu0 0.0
    %130 = vmatprep.subr.mxu0 0.0
    %131 = vmatpush1.xpose.msra.mxu0 0.0
    %132 = vmatprep.subr.mxu0 0.0
    %133 = vmatpush1.xpose.msra.mxu0 0.0
    %134 = vmatprep.subr.mxu0 0.0
    %135 = vmatpush1.xpose.msra.mxu0 0.0
    %136 = vmatprep.subr.mxu0 0.0
    %137 = vmatpush1.xpose.msra.mxu0 0.0
    %138 = vmatprep.subr.mxu0 0.0
    %139 = vmatpush1.xpose.msra.mxu0 0.0
    %140 = vmatprep.subr.mxu0 0.0
    %141 = vmatpush1.xpose.msra.mxu0 0.0
    %142 = vmatprep.subr.mxu0 0.0
    %143 = vmatpush1.xpose.msra.mxu0 0.0
    %144 = vmatprep.subr.mxu0 0.0
    %145 = vmatpush1.xpose.msra.mxu0 0.0
    %146 = vmatprep.subr.mxu0 0.0
    %147 = vmatpush1.xpose.msra.mxu0 0.0
    %148 = vmatprep.subr.mxu0 0.0
    %149 = vmatpush1.xpose.msra.mxu0 0.0
    %150 = vmatprep.subr.mxu0 0.0
    %151 = vmatpush1.xpose.msra.mxu0 0.0
    %152 = vmatprep.subr.mxu0 0.0
    %153 = vmatpush1.xpose.msra.mxu0 0.0
    %154 = vmatprep.mubr.f32.mxu0 0.0
    %155 = vmatmul.mubr.f32.gmra.mrb[0].mxu0 %v40
    %v156 = vpop.f32.mrb[0].mxu0
    %v157 = vadd.f32 %v36, %v156
    %v158 = vpop.f32.mrb[0].mxu0
    %159 = vdwg.mxu0
    %vm160 = vcmp.ge.f32.partialorder %v157, 0.0
    %v161 = vmul.f32 %v157, 0.01
    %v162 = vsel %vm160, %v157, %v161
    %vm163 = vcmask 1041408
    %v164 = vsel %vm163, %v162, -inf
    %v165 = vrot.slane %v164, 4
    %v166 = vmax.f32 %v164, %v165
    %v167 = vrot.slane %v166, 2
    %v168 = vmax.f32 %v166, %v167
    %v169 = vrot.slane %v168, 1
    %v170 = vmax.f32 %v168, %v169
    %v171 = vsub.f32 %v162, %v170
    %v172 = vmul.f32 %v171, 1.442695
    %v173 = vpow.pop %v172
    %v174 = vsel %vm163, %v173, 0.0
    %v175 = vrot.slane %v174, 4
    %v176 = vadd.f32 %v174, %v175
    %v177 = vrot.slane %v176, 2
    %v178 = vadd.f32 %v176, %v177
    %v179 = vrot.slane %v178, 1
    %v180 = vadd.f32 %v178, %v179
    %v181 = vrcp.pop %v180
    %v182 = vmul.f32 %v173, %v181
    %183 = vst [vmem:[#allocation2] sm:$0x3] %v182
    // Predicated region
    $region14: #{tpu_custom_call.1} parent=1 // pred_check
      _
    $region15: #{tpu_custom_call.1} parent=1 // pred_check_branch
      %185 = sbr.rel (0) target = $region17
    $region16: #{tpu_custom_call.1} parent=1 // pred_region
      %s187 = ssub.s32 32, 32
      %188 = vsyncadd [#allocation3], %s187
      %s190 = sshll.u32 [#allocation2], 4
      %s191 = int_to_ptr.vmem [resolvable:$true] %s190
      %193 = dma.vmem_to_hbm [thread:$0]  %s191, 32, %s3, [#allocation3]
    $region17: #{tpu_custom_call.1} parent=1 // pred_fallthru
      _
    // Predicated region
    $region18: #{tpu_custom_call.1} parent=1 // pred_check
      _
    $region19: #{tpu_custom_call.1} parent=1 // pred_check_branch
      %195 = sbr.rel (0) target = $region21
    $region20: #{tpu_custom_call.1} parent=1 // pred_region
      %196 = dma.done [#allocation3], 32
    $region21: #{tpu_custom_call.1} parent=1 // pred_fallthru
      _
    %197 = vsyncpa [#allocation3], 1

</llo_original>
